<compile_context>
chip_gen: v7x
topology: tpu7x:2x2x1
jax: 0.10.0
libtpu: 0.0.40
codegen_flags: <defaults>
</compile_context>

<pallas_src>
import math
import jax
import jax.numpy as jnp
from jax.experimental import pallas as pl
from jax.experimental.pallas import tpu as pltpu


def mlp_softmax_kernel(x_ref, w1_ref, b1_ref, w2_ref, b2_ref, w3_ref, b3_ref, out_ref):
    # Hidden layer 1: Linear + ReLU   (Dropout == identity in eval mode)
    h1 = jnp.dot(x_ref[...], w1_ref[...], preferred_element_type=jnp.float32) + b1_ref[...]
    h1 = jnp.maximum(h1, 0.0)
    # Hidden layer 2: Linear + ReLU
    h2 = jnp.dot(h1, w2_ref[...], preferred_element_type=jnp.float32) + b2_ref[...]
    h2 = jnp.maximum(h2, 0.0)
    # Output layer: Linear
    logits = jnp.dot(h2, w3_ref[...], preferred_element_type=jnp.float32) + b3_ref[...]
    # Numerically stable softmax over dim=1; reciprocal on the EUP slot.
    m = jnp.max(logits, axis=1, keepdims=True)
    e = jnp.exp(logits - m)
    denom = jnp.sum(e, axis=1, keepdims=True)
    out_ref[...] = e * pl.reciprocal(denom, approx=False)


def _round_up(n, m):
    return ((n + m - 1) // m) * m


def neural_network_forward(x, params, *, block_b=1024):
    """x: (B, feature_dim) float32; params: dict of (in,out) weights & (1,out) biases."""
    w1, b1, w2, b2, w3, b3 = (params["w1"], params["b1"], params["w2"],
                              params["b2"], params["w3"], params["b3"])
    B, F = x.shape
    out_dim = w3.shape[1]

    # Batch tile: multiple of 8 (sublane), capped at block_b; pad batch to a tile multiple.
    tb = min(block_b, _round_up(B, 8))
    b_padded = _round_up(B, tb)
    if b_padded != B:
        x = jnp.pad(x, ((0, b_padded - B), (0, 0)))
    grid = (pl.cdiv(b_padded, tb),)

    # Weights/biases stay VMEM-resident across all batch tiles.
    const = lambda shape: pl.BlockSpec(shape, lambda i: (0, 0))

    out = pl.pallas_call(
        mlp_softmax_kernel,
        out_shape=jax.ShapeDtypeStruct((b_padded, out_dim), jnp.float32),
        grid=grid,
        in_specs=[
            pl.BlockSpec((tb, F), lambda i: (i, 0)),      # x: streamed by batch tile
            const(w1.shape), const(b1.shape),
            const(w2.shape), const(b2.shape),
            const(w3.shape), const(b3.shape),
        ],
        out_specs=pl.BlockSpec((tb, out_dim), lambda i: (i, 0)),
        compiler_params=pltpu.CompilerParams(
            dimension_semantics=("parallel",),            # megacore-shard batch tiles (v7x)
            vmem_limit_bytes=64 * 1024 * 1024,
        ),
    )(x, w1, b1, w2, b2, w3, b3)

    return out[:B] if b_padded != B else out


def init_linear(key, fan_in, fan_out):
    """Deterministic init mimicking PyTorch nn.Linear default (uniform +/- 1/sqrt(fan_in)).
    Weight returned transposed: (fan_in, fan_out)."""
    kw, kb = jax.random.split(key)
    bound = 1.0 / math.sqrt(fan_in)
    w = jax.random.uniform(kw, (fan_in, fan_out), jnp.float32, -bound, bound)
    b = jax.random.uniform(kb, (1, fan_out), jnp.float32, -bound, bound)
    return w, b


def make_params(key, feature_dim, hidden_dims, output_dim):
    k1, k2, k3 = jax.random.split(key, 3)
    w1, b1 = init_linear(k1, feature_dim, hidden_dims[0])
    w2, b2 = init_linear(k2, hidden_dims[0], hidden_dims[1])
    w3, b3 = init_linear(k3, hidden_dims[1], output_dim)
    return {"w1": w1, "b1": b1, "w2": w2, "b2": b2, "w3": w3, "b3": b3}


def ref_forward(x, p):
    h1 = jnp.maximum(x @ p["w1"] + p["b1"], 0.0)
    h2 = jnp.maximum(h1 @ p["w2"] + p["b2"], 0.0)
    logits = h2 @ p["w3"] + p["b3"]
    return jax.nn.softmax(logits, axis=1)


if __name__ == "__main__":
    feature_dim = 32
    hidden_dims = [64, 32]
    output_dim = 16

    key = jax.random.PRNGKey(0)
    kx, kp, kx2 = jax.random.split(key, 3)
    params = make_params(kp, feature_dim, hidden_dims, output_dim)

    # Small batch: exercises the single-tile (block == full array) path.
    batch = 8
    x = jax.random.normal(kx, (batch, feature_dim), jnp.float32)
    probs = jax.block_until_ready(neural_network_forward(x, params))
    assert probs.shape == (batch, output_dim)
    assert jnp.allclose(jnp.sum(probs, axis=1), 1.0, atol=1e-5)
    assert jnp.allclose(probs, ref_forward(x, params), atol=1e-5)

    # Larger, non-tile-multiple batch: exercises the multi-step grid + padding path.
    batch2 = 2500
    x2 = jax.random.normal(kx2, (batch2, feature_dim), jnp.float32)
    probs2 = jax.block_until_ready(neural_network_forward(x2, params))
    assert probs2.shape == (batch2, output_dim)
    assert jnp.allclose(jnp.sum(probs2, axis=1), 1.0, atol=1e-5)
    assert jnp.allclose(probs2, ref_forward(x2, params), atol=1e-5)

    print("KERNEL_OK")
</pallas_src>

<mosaic_0001>
module attributes {stable_mosaic.version = 11 : i64} {
  func.func @mlp_softmax_kernel(%arg0: i32, %arg1: memref<8x32xf32, #tpu.memory_space<vmem>>, %arg2: memref<32x64xf32, #tpu.memory_space<vmem>>, %arg3: memref<1x64xf32, #tpu.memory_space<vmem>>, %arg4: memref<64x32xf32, #tpu.memory_space<vmem>>, %arg5: memref<1x32xf32, #tpu.memory_space<vmem>>, %arg6: memref<32x16xf32, #tpu.memory_space<vmem>>, %arg7: memref<1x16xf32, #tpu.memory_space<vmem>>, %arg8: memref<8x16xf32, #tpu.memory_space<vmem>>) attributes {dimension_semantics = [#tpu.dimension_semantics<parallel>], iteration_bounds = array<i64: 1>, scalar_prefetch = 0 : i64, scratch_operands = 0 : i64, tpu.core_type = #tpu.core_type<tc>, window_params = [{transform_indices = @transform_0, window_bounds = array<i64: 8, 32>}, {pipeline_mode = #tpu.pipeline_mode<synchronous>, transform_indices = @transform_1, window_bounds = array<i64: 32, 64>}, {pipeline_mode = #tpu.pipeline_mode<synchronous>, transform_indices = @transform_2, window_bounds = array<i64: 1, 64>}, {pipeline_mode = #tpu.pipeline_mode<synchronous>, transform_indices = @transform_3, window_bounds = array<i64: 64, 32>}, {pipeline_mode = #tpu.pipeline_mode<synchronous>, transform_indices = @transform_4, window_bounds = array<i64: 1, 32>}, {pipeline_mode = #tpu.pipeline_mode<synchronous>, transform_indices = @transform_5, window_bounds = array<i64: 32, 16>}, {pipeline_mode = #tpu.pipeline_mode<synchronous>, transform_indices = @transform_6, window_bounds = array<i64: 1, 16>}, {transform_indices = @transform_7, window_bounds = array<i64: 8, 16>}]} {
    %c0 = arith.constant 0 : index
    %c0_0 = arith.constant 0 : index
    %0 = vector.load %arg1[%c0, %c0_0] : memref<8x32xf32, #tpu.memory_space<vmem>>, vector<8x32xf32>
    %c0_1 = arith.constant 0 : index
    %c0_2 = arith.constant 0 : index
    %1 = vector.load %arg2[%c0_1, %c0_2] : memref<32x64xf32, #tpu.memory_space<vmem>>, vector<32x64xf32>
    %cst = arith.constant dense<0.000000e+00> : vector<8x64xf32>
    %2 = tpu.matmul %0, %1, %cst {dimension_numbers = #tpu.dot_dimension_numbers<[1], [0], [0], [1], [0, 0, 1, 1], [], []>} : vector<8x32xf32>, vector<32x64xf32>, vector<8x64xf32> -> vector<8x64xf32>
    %c0_3 = arith.constant 0 : index
    %c0_4 = arith.constant 0 : index
    %3 = vector.load %arg3[%c0_3, %c0_4] : memref<1x64xf32, #tpu.memory_space<vmem>>, vector<1x64xf32>
    %4 = vector.broadcast %3 : vector<1x64xf32> to vector<8x64xf32>
    %5 = arith.addf %2, %4 : vector<8x64xf32>
    %cst_5 = arith.constant 0.000000e+00 : f32
    %6 = vector.broadcast %cst_5 : f32 to vector<8x64xf32>
    %7 = arith.maximumf %5, %6 : vector<8x64xf32>
    %c0_6 = arith.constant 0 : index
    %c0_7 = arith.constant 0 : index
    %8 = vector.load %arg4[%c0_6, %c0_7] : memref<64x32xf32, #tpu.memory_space<vmem>>, vector<64x32xf32>
    %cst_8 = arith.constant dense<0.000000e+00> : vector<8x32xf32>
    %9 = tpu.matmul %7, %8, %cst_8 {dimension_numbers = #tpu.dot_dimension_numbers<[1], [0], [0], [1], [0, 0, 1, 1], [], []>} : vector<8x64xf32>, vector<64x32xf32>, vector<8x32xf32> -> vector<8x32xf32>
    %c0_9 = arith.constant 0 : index
    %c0_10 = arith.constant 0 : index
    %10 = vector.load %arg5[%c0_9, %c0_10] : memref<1x32xf32, #tpu.memory_space<vmem>>, vector<1x32xf32>
    %11 = vector.broadcast %10 : vector<1x32xf32> to vector<8x32xf32>
    %12 = arith.addf %9, %11 : vector<8x32xf32>
    %cst_11 = arith.constant 0.000000e+00 : f32
    %13 = vector.broadcast %cst_11 : f32 to vector<8x32xf32>
    %14 = arith.maximumf %12, %13 : vector<8x32xf32>
    %c0_12 = arith.constant 0 : index
    %c0_13 = arith.constant 0 : index
    %15 = vector.load %arg6[%c0_12, %c0_13] : memref<32x16xf32, #tpu.memory_space<vmem>>, vector<32x16xf32>
    %cst_14 = arith.constant dense<0.000000e+00> : vector<8x16xf32>
    %16 = tpu.matmul %14, %15, %cst_14 {dimension_numbers = #tpu.dot_dimension_numbers<[1], [0], [0], [1], [0, 0, 1, 1], [], []>} : vector<8x32xf32>, vector<32x16xf32>, vector<8x16xf32> -> vector<8x16xf32>
    %c0_15 = arith.constant 0 : index
    %c0_16 = arith.constant 0 : index
    %17 = vector.load %arg7[%c0_15, %c0_16] : memref<1x16xf32, #tpu.memory_space<vmem>>, vector<1x16xf32>
    %18 = vector.broadcast %17 : vector<1x16xf32> to vector<8x16xf32>
    %19 = arith.addf %16, %18 : vector<8x16xf32>
    %cst_17 = arith.constant dense<0xFF800000> : vector<8xf32>
    %20 = vector.multi_reduction <maximumf>, %19, %cst_17 [1] : vector<8x16xf32> to vector<8xf32>
    %21 = vector.shape_cast %20 : vector<8xf32> to vector<8x1xf32>
    %22 = vector.broadcast %21 : vector<8x1xf32> to vector<8x16xf32>
    %23 = arith.subf %19, %22 : vector<8x16xf32>
    %24 = math.exp %23 : vector<8x16xf32>
    %cst_18 = arith.constant dense<0.000000e+00> : vector<8xf32>
    %25 = vector.multi_reduction <add>, %24, %cst_18 [1] : vector<8x16xf32> to vector<8xf32>
    %26 = vector.shape_cast %25 : vector<8xf32> to vector<8x1xf32>
    %27 = tpu.reciprocal %26 : vector<8x1xf32> -> vector<8x1xf32>
    %28 = vector.broadcast %27 : vector<8x1xf32> to vector<8x16xf32>
    %29 = arith.mulf %24, %28 : vector<8x16xf32>
    %c0_19 = arith.constant 0 : index
    %c0_20 = arith.constant 0 : index
    %30 = vector.load %arg8[%c0_19, %c0_20] : memref<8x16xf32, #tpu.memory_space<vmem>>, vector<8x16xf32>
    tpu.vector_store %arg8[%c0_19, %c0_20], %29 {strides = array<i32>} : memref<8x16xf32, #tpu.memory_space<vmem>>, vector<8x16xf32>,
    return
  }
  func.func @transform_0(%arg0: i32) -> (i32, i32) {
    %c0_i32 = arith.constant 0 : i32
    %c0_i32_0 = arith.constant 0 : i32
    return %arg0, %c0_i32 : i32, i32
  }
  func.func @transform_1(%arg0: i32) -> (i32, i32) {
    %c0_i32 = arith.constant 0 : i32
    %c0_i32_0 = arith.constant 0 : i32
    %c0_i32_1 = arith.constant 0 : i32
    return %c0_i32, %c0_i32_0 : i32, i32
  }
  func.func @transform_2(%arg0: i32) -> (i32, i32) {
    %c0_i32 = arith.constant 0 : i32
    %c0_i32_0 = arith.constant 0 : i32
    %c0_i32_1 = arith.constant 0 : i32
    return %c0_i32, %c0_i32_0 : i32, i32
  }
  func.func @transform_3(%arg0: i32) -> (i32, i32) {
    %c0_i32 = arith.constant 0 : i32
    %c0_i32_0 = arith.constant 0 : i32
    %c0_i32_1 = arith.constant 0 : i32
    return %c0_i32, %c0_i32_0 : i32, i32
  }
  func.func @transform_4(%arg0: i32) -> (i32, i32) {
    %c0_i32 = arith.constant 0 : i32
    %c0_i32_0 = arith.constant 0 : i32
    %c0_i32_1 = arith.constant 0 : i32
    return %c0_i32, %c0_i32_0 : i32, i32
  }
  func.func @transform_5(%arg0: i32) -> (i32, i32) {
    %c0_i32 = arith.constant 0 : i32
    %c0_i32_0 = arith.constant 0 : i32
    %c0_i32_1 = arith.constant 0 : i32
    return %c0_i32, %c0_i32_0 : i32, i32
  }
  func.func @transform_6(%arg0: i32) -> (i32, i32) {
    %c0_i32 = arith.constant 0 : i32
    %c0_i32_0 = arith.constant 0 : i32
    %c0_i32_1 = arith.constant 0 : i32
    return %c0_i32, %c0_i32_0 : i32, i32
  }
  func.func @transform_7(%arg0: i32) -> (i32, i32) {
    %c0_i32 = arith.constant 0 : i32
    %c0_i32_0 = arith.constant 0 : i32
    return %arg0, %c0_i32 : i32, i32
  }
}

</mosaic_0001>

<llo_original>
// kernel: tpu_custom_call.1
$region0: #{tpu_custom_call.1}
  #allocation0 [shape = 'u32[]', space=smem, size = 0x4, offset = 0x4, fixed_abs, tag = 'smem constant byte address 0x4 - core index']
  #allocation1 [shape = 'u32[144,128]{1,0:T(1,128)}', space=vmem, size = 0x12000, scoped, tag = 'internal scratch']
  %s0 = inlined_call_operand.hbm [shape: f32[8,32], index: 0, kind: input, shape index: {}]
  %s1 = inlined_call_operand.hbm [shape: f32[32,64], index: 1, kind: input, shape index: {}]
  %s2 = inlined_call_operand.hbm [shape: f32[1,64], index: 2, kind: input, shape index: {}]
  %s3 = inlined_call_operand.hbm [shape: f32[64,32], index: 3, kind: input, shape index: {}]
  %s4 = inlined_call_operand.hbm [shape: f32[1,32], index: 4, kind: input, shape index: {}]
  %s5 = inlined_call_operand.hbm [shape: f32[32,16], index: 5, kind: input, shape index: {}]
  %s6 = inlined_call_operand.hbm [shape: f32[1,16], index: 6, kind: input, shape index: {}]
  %s7 = inlined_call_operand.hbm [shape: f32[8,16], index: 7, kind: output, shape index: {}]
  %s8 = sld [smem:[#allocation0]]
  $region66: #{tpu_custom_call.1} parent=0
    _
  %s10 = ssub.s32 1, %s8
  %s11 = scalar_select 0, %s10, %s8
  $region1: #{tpu_custom_call.1} parent=0
    #allocation2 [shape = 'u8[4096]{0}', space=vmem, size = 0x1000, scoped, tag = 'input window, operand 0, single buffered']
    #allocation3 [shape = 's32[1]{0}', space=sflag, size = 0x4, scoped, tag = 'scoped memory for tpu_custom_call.1']
    #allocation4 [shape = 's32[1]{0}', space=sflag, size = 0x4, scoped, tag = 'scoped memory for tpu_custom_call.1']
    #allocation5 [shape = 'u8[16384]{0}', space=vmem, size = 0x4000, scoped, tag = 'input window, operand 1, single buffered']
    #allocation6 [shape = 's32[1]{0}', space=sflag, size = 0x4, scoped, tag = 'scoped memory for tpu_custom_call.1']
    #allocation7 [shape = 'u8[512]{0}', space=vmem, size = 0x400, scoped, tag = 'input window, operand 2, single buffered']
    #allocation8 [shape = 'u8[32768]{0}', space=vmem, size = 0x8000, scoped, tag = 'input window, operand 3, single buffered']
    #allocation9 [shape = 's32[1]{0}', space=sflag, size = 0x4, scoped, tag = 'scoped memory for tpu_custom_call.1']
    #allocation10 [shape = 'u8[512]{0}', space=vmem, size = 0x400, scoped, tag = 'input window, operand 4, single buffered']
    #allocation11 [shape = 'u8[16384]{0}', space=vmem, size = 0x4000, scoped, tag = 'input window, operand 5, single buffered']
    #allocation12 [shape = 's32[1]{0}', space=sflag, size = 0x4, scoped, tag = 'scoped memory for tpu_custom_call.1']
    #allocation13 [shape = 'u8[512]{0}', space=vmem, size = 0x400, scoped, tag = 'input window, operand 6, single buffered']
    #allocation14 [shape = 'u8[4096]{0}', space=vmem, size = 0x1000, scoped, tag = 'output window, operand 0, single buffered']
    %12 = vsyncpa [#allocation3], 0
    %13 = vsyncpa [#allocation6], 0
    %14 = vsyncpa [#allocation9], 0
    %15 = vsyncpa [#allocation12], 0
    %16 = vsyncpa [#allocation4], 0
    // Predicated region
    $region2: #{tpu_custom_call.1} parent=1 // pred_check
      _
    $region3: #{tpu_custom_call.1} parent=1 // pred_check_branch
      %18 = sbr.rel (0) target = $region5
    $region4: #{tpu_custom_call.1} parent=1 // pred_region
      %s20 = ssub.s32 128, 128
      %21 = vsyncadd [#allocation3], %s20
      %s23 = sshll.u32 [#allocation2], 4
      %s24 = int_to_ptr.vmem [resolvable:$true] %s23
      %26 = dma.hbm_to_vmem [thread:$0]  %s0, 128, %s24, [#allocation3]
    $region5: #{tpu_custom_call.1} parent=1 // pred_fallthru
      _
    // Predicated region
    $region6: #{tpu_custom_call.1} parent=1 // pred_check
      _
    $region7: #{tpu_custom_call.1} parent=1 // pred_check_branch
      %28 = sbr.rel (0) target = $region9
    $region8: #{tpu_custom_call.1} parent=1 // pred_region
      %s30 = ssub.s32 512, 512
      %31 = vsyncadd [#allocation6], %s30
      %s32 = sshll.u32 [#allocation5], 4
      %s33 = int_to_ptr.vmem [resolvable:$true] %s32
      %38 = dma.hbm_to_vmem [thread:$0]  %s1, 512, %s33, [#allocation6], 128, 128, 8
    $region9: #{tpu_custom_call.1} parent=1 // pred_fallthru
      _
    // Predicated region
    $region10: #{tpu_custom_call.1} parent=1 // pred_check
      _
    $region11: #{tpu_custom_call.1} parent=1 // pred_check_branch
      %40 = sbr.rel (0) target = $region13
    $region12: #{tpu_custom_call.1} parent=1 // pred_region
      %s42 = ssub.s32 16, 16
      %43 = vsyncadd [#allocation6], %s42
      %s45 = sshll.u32 [#allocation7], 4
      %s46 = int_to_ptr.vmem [resolvable:$true] %s45
      %48 = dma.hbm_to_vmem [thread:$0]  %s2, 16, %s46, [#allocation6]
    $region13: #{tpu_custom_call.1} parent=1 // pred_fallthru
      _
    // Predicated region
    $region14: #{tpu_custom_call.1} parent=1 // pred_check
      _
    $region15: #{tpu_custom_call.1} parent=1 // pred_check_branch
      %50 = sbr.rel (0) target = $region17
    $region16: #{tpu_custom_call.1} parent=1 // pred_region
      %s52 = ssub.s32 1024, 1024
      %53 = vsyncadd [#allocation9], %s52
      %s54 = sshll.u32 [#allocation8], 4
      %s55 = int_to_ptr.vmem [resolvable:$true] %s54
      %60 = dma.hbm_to_vmem [thread:$0]  %s3, 1024, %s55, [#allocation9], 128, 128, 8
    $region17: #{tpu_custom_call.1} parent=1 // pred_fallthru
      _
    // Predicated region
    $region18: #{tpu_custom_call.1} parent=1 // pred_check
      _
    $region19: #{tpu_custom_call.1} parent=1 // pred_check_branch
      %62 = sbr.rel (0) target = $region21
    $region20: #{tpu_custom_call.1} parent=1 // pred_region
      %s64 = ssub.s32 16, 16
      %65 = vsyncadd [#allocation9], %s64
      %s67 = sshll.u32 [#allocation10], 4
      %s68 = int_to_ptr.vmem [resolvable:$true] %s67
      %70 = dma.hbm_to_vmem [thread:$0]  %s4, 16, %s68, [#allocation9]
    $region21: #{tpu_custom_call.1} parent=1 // pred_fallthru
      _
    // Predicated region
    $region22: #{tpu_custom_call.1} parent=1 // pred_check
      _
    $region23: #{tpu_custom_call.1} parent=1 // pred_check_branch
      %72 = sbr.rel (0) target = $region25
    $region24: #{tpu_custom_call.1} parent=1 // pred_region
      %s74 = ssub.s32 512, 512
      %75 = vsyncadd [#allocation12], %s74
      %s76 = sshll.u32 [#allocation11], 4
      %s77 = int_to_ptr.vmem [resolvable:$true] %s76
      %82 = dma.hbm_to_vmem [thread:$0]  %s5, 512, %s77, [#allocation12], 128, 128, 8
    $region25: #{tpu_custom_call.1} parent=1 // pred_fallthru
      _
    // Predicated region
    $region26: #{tpu_custom_call.1} parent=1 // pred_check
      _
    $region27: #{tpu_custom_call.1} parent=1 // pred_check_branch
      %84 = sbr.rel (0) target = $region29
    $region28: #{tpu_custom_call.1} parent=1 // pred_region
      %s86 = ssub.s32 16, 16
      %87 = vsyncadd [#allocation12], %s86
      %s89 = sshll.u32 [#allocation13], 4
      %s90 = int_to_ptr.vmem [resolvable:$true] %s89
      %92 = dma.hbm_to_vmem [thread:$0]  %s6, 16, %s90, [#allocation12]
    $region29: #{tpu_custom_call.1} parent=1 // pred_fallthru
      _
    // Predicated region
    $region30: #{tpu_custom_call.1} parent=1 // pred_check
      _
    $region31: #{tpu_custom_call.1} parent=1 // pred_check_branch
      %94 = sbr.rel (0) target = $region33
    $region32: #{tpu_custom_call.1} parent=1 // pred_region
      %95 = dma.done [#allocation3], 128
    $region33: #{tpu_custom_call.1} parent=1 // pred_fallthru
      _
    // Predicated region
    $region34: #{tpu_custom_call.1} parent=1 // pred_check
      _
    $region35: #{tpu_custom_call.1} parent=1 // pred_check_branch
      %97 = sbr.rel (0) target = $region37
    $region36: #{tpu_custom_call.1} parent=1 // pred_region
      %98 = dma.done [#allocation6], 512
    $region37: #{tpu_custom_call.1} parent=1 // pred_fallthru
      _
    // Predicated region
    $region38: #{tpu_custom_call.1} parent=1 // pred_check
      _
    $region39: #{tpu_custom_call.1} parent=1 // pred_check_branch
      %100 = sbr.rel (0) target = $region41
    $region40: #{tpu_custom_call.1} parent=1 // pred_region
      %101 = dma.done [#allocation6], 16
    $region41: #{tpu_custom_call.1} parent=1 // pred_fallthru
      _
    // Predicated region
    $region42: #{tpu_custom_call.1} parent=1 // pred_check
      _
    $region43: #{tpu_custom_call.1} parent=1 // pred_check_branch
      %103 = sbr.rel (0) target = $region45
    $region44: #{tpu_custom_call.1} parent=1 // pred_region
      %104 = dma.done [#allocation9], 1024
    $region45: #{tpu_custom_call.1} parent=1 // pred_fallthru
      _
    // Predicated region
    $region46: #{tpu_custom_call.1} parent=1 // pred_check
      _
    $region47: #{tpu_custom_call.1} parent=1 // pred_check_branch
      %106 = sbr.rel (0) target = $region49
    $region48: #{tpu_custom_call.1} parent=1 // pred_region
      %107 = dma.done [#allocation9], 16
    $region49: #{tpu_custom_call.1} parent=1 // pred_fallthru
      _
    // Predicated region
    $region50: #{tpu_custom_call.1} parent=1 // pred_check
      _
    $region51: #{tpu_custom_call.1} parent=1 // pred_check_branch
      %109 = sbr.rel (0) target = $region53
    $region52: #{tpu_custom_call.1} parent=1 // pred_region
      %110 = dma.done [#allocation12], 512
    $region53: #{tpu_custom_call.1} parent=1 // pred_fallthru
      _
    // Predicated region
    $region54: #{tpu_custom_call.1} parent=1 // pred_check
      _
    $region55: #{tpu_custom_call.1} parent=1 // pred_check_branch
      %112 = sbr.rel (0) target = $region57
    $region56: #{tpu_custom_call.1} parent=1 // pred_region
      %113 = dma.done [#allocation12], 16
    $region57: #{tpu_custom_call.1} parent=1 // pred_fallthru
      _
    %v114 = vld [vmem:[#allocation2] sm:$0xff]
    %v115 = vld [vmem:[#allocation5] sm:$0xff]
    %v116 = vld [vmem:[#allocation5 + $0x8] sm:$0xff]
    %v117 = vld [vmem:[#allocation5 + $0x10] sm:$0xff]
    %v118 = vld [vmem:[#allocation5 + $0x18] sm:$0xff]
    %v119 = vld [vmem:[#allocation7] sm:$0x1]
    %v121 = vlaneseq
    %v122 = vshrl.u32 %v121, 7
    %v123 = vsub.s32 0, %v122
    %v124 = vrot.slane %v119, %v123
    %vm126 = vcmask 261120
    %v128 = vsel %vm126, %v114, 0
    %130 = vmatprep.subr.mxu0 0.0
    %131 = vmatpush1.msra.mxu0 %v115
    %132 = vmatprep.subr.mxu0 0.0
    %133 = vmatpush1.msra.mxu0 %v116
    %134 = vmatprep.subr.mxu0 0.0
    %135 = vmatpush1.msra.mxu0 %v117
    %136 = vmatprep.subr.mxu0 0.0
    %137 = vmatpush1.msra.mxu0 %v118
    %138 = vmatprep.subr.mxu0 0.0
    %139 = vmatpush1.msra.mxu0 0.0
    %140 = vmatprep.subr.mxu0 0.0
    %141 = vmatpush1.msra.mxu0 0.0
    %142 = vmatprep.subr.mxu0 0.0
    %143 = vmatpush1.msra.mxu0 0.0
    %144 = vmatprep.subr.mxu0 0.0
    %145 = vmatpush1.msra.mxu0 0.0
    %146 = vmatprep.subr.mxu0 0.0
    %147 = vmatpush1.msra.mxu0 0.0
    %148 = vmatprep.subr.mxu0 0.0
    %149 = vmatpush1.msra.mxu0 0.0
    %150 = vmatprep.subr.mxu0 0.0
    %151 = vmatpush1.msra.mxu0 0.0
    %152 = vmatprep.subr.mxu0 0.0
    %153 = vmatpush1.msra.mxu0 0.0
    %154 = vmatprep.subr.mxu0 0.0
    %155 = vmatpush1.msra.mxu0 0.0
    %156 = vmatprep.subr.mxu0 0.0
    %157 = vmatpush1.msra.mxu0 0.0
    %158 = vmatprep.subr.mxu0 0.0
    %159 = vmatpush1.msra.mxu0 0.0
    %160 = vmatprep.subr.mxu0 0.0
    %161 = vmatpush1.msra.mxu0 0.0
    %162 = vmatprep.subr.mxu0 0.0
    %163 = vmatpush1.msra.mxu0 0.0
    %164 = vmatprep.subr.mxu0 0.0
    %165 = vmatpush1.msra.mxu0 0.0
    %166 = vmatprep.subr.mxu0 0.0
    %167 = vmatpush1.msra.mxu0 0.0
    %168 = vmatprep.subr.mxu0 0.0
    %169 = vmatpush1.msra.mxu0 0.0
    %170 = vmatprep.subr.mxu0 0.0
    %171 = vmatpush1.msra.mxu0 0.0
    %172 = vmatprep.subr.mxu0 0.0
    %173 = vmatpush1.msra.mxu0 0.0
    %174 = vmatprep.subr.mxu0 0.0
    %175 = vmatpush1.msra.mxu0 0.0
    %176 = vmatprep.subr.mxu0 0.0
    %177 = vmatpush1.msra.mxu0 0.0
    %178 = vmatprep.subr.mxu0 0.0
    %179 = vmatpush1.msra.mxu0 0.0
    %180 = vmatprep.subr.mxu0 0.0
    %181 = vmatpush1.msra.mxu0 0.0
    %182 = vmatprep.subr.mxu0 0.0
    %183 = vmatpush1.msra.mxu0 0.0
    %184 = vmatprep.subr.mxu0 0.0
    %185 = vmatpush1.msra.mxu0 0.0
    %186 = vmatprep.subr.mxu0 0.0
    %187 = vmatpush1.msra.mxu0 0.0
    %188 = vmatprep.subr.mxu0 0.0
    %189 = vmatpush1.msra.mxu0 0.0
    %190 = vmatprep.subr.mxu0 0.0
    %191 = vmatpush1.msra.mxu0 0.0
    %192 = vmatprep.subr.mxu0 0.0
    %193 = vmatpush1.msra.mxu0 0.0
    %194 = vmatprep.mubr.f32.mxu0 0.0
    %195 = vmatmul.mubr.f32.gmra.mrb[0].mxu0 %v128
    %v196 = vpop.f32.mrb[0].mxu0
    %v197 = vadd.f32 %v124, %v196
    %v198 = vpop.f32.mrb[0].mxu0
    %199 = vdwg.mxu0
    %v200 = vmax.f32 %v197, 0.0
    %v201 = vld [vmem:[#allocation8] sm:$0xff]
    %v202 = vld [vmem:[#allocation8 + $0x8] sm:$0xff]
    %v203 = vld [vmem:[#allocation8 + $0x10] sm:$0xff]
    %v204 = vld [vmem:[#allocation8 + $0x18] sm:$0xff]
    %v205 = vld [vmem:[#allocation8 + $0x20] sm:$0xff]
    %v206 = vld [vmem:[#allocation8 + $0x28] sm:$0xff]
    %v207 = vld [vmem:[#allocation8 + $0x30] sm:$0xff]
    %v208 = vld [vmem:[#allocation8 + $0x38] sm:$0xff]
    %v209 = vld [vmem:[#allocation10] sm:$0x1]
    %v211 = vlaneseq
    %v212 = vshrl.u32 %v211, 7
    %v213 = vsub.s32 0, %v212
    %v214 = vrot.slane %v209, %v213
    %vm216 = vcmask 523264
    %v218 = vsel %vm216, %v200, 0
    %220 = vmatprep.subr.mxu0 0.0
    %221 = vmatpush1.msra.mxu0 %v201
    %222 = vmatprep.subr.mxu0 0.0
    %223 = vmatpush1.msra.mxu0 %v202
    %224 = vmatprep.subr.mxu0 0.0
    %225 = vmatpush1.msra.mxu0 %v203
    %226 = vmatprep.subr.mxu0 0.0
    %227 = vmatpush1.msra.mxu0 %v204
    %228 = vmatprep.subr.mxu0 0.0
    %229 = vmatpush1.msra.mxu0 %v205
    %230 = vmatprep.subr.mxu0 0.0
    %231 = vmatpush1.msra.mxu0 %v206
    %232 = vmatprep.subr.mxu0 0.0
    %233 = vmatpush1.msra.mxu0 %v207
    %234 = vmatprep.subr.mxu0 0.0
    %235 = vmatpush1.msra.mxu0 %v208
    %236 = vmatprep.subr.mxu0 0.0
    %237 = vmatpush1.msra.mxu0 0.0
    %238 = vmatprep.subr.mxu0 0.0
    %239 = vmatpush1.msra.mxu0 0.0
    %240 = vmatprep.subr.mxu0 0.0
    %241 = vmatpush1.msra.mxu0 0.0
    %242 = vmatprep.subr.mxu0 0.0
    %243 = vmatpush1.msra.mxu0 0.0
    %244 = vmatprep.subr.mxu0 0.0
    %245 = vmatpush1.msra.mxu0 0.0
    %246 = vmatprep.subr.mxu0 0.0
    %247 = vmatpush1.msra.mxu0 0.0
    %248 = vmatprep.subr.mxu0 0.0
    %249 = vmatpush1.msra.mxu0 0.0
    %250 = vmatprep.subr.mxu0 0.0
    %251 = vmatpush1.msra.mxu0 0.0
    %252 = vmatprep.subr.mxu0 0.0
    %253 = vmatpush1.msra.mxu0 0.0
    %254 = vmatprep.subr.mxu0 0.0
    %255 = vmatpush1.msra.mxu0 0.0
    %256 = vmatprep.subr.mxu0 0.0
    %257 = vmatpush1.msra.mxu0 0.0
    %258 = vmatprep.subr.mxu0 0.0
    %259 = vmatpush1.msra.mxu0 0.0
    %260 = vmatprep.subr.mxu0 0.0
    %261 = vmatpush1.msra.mxu0 0.0
    %262 = vmatprep.subr.mxu0 0.0
    %263 = vmatpush1.msra.mxu0 0.0
    %264 = vmatprep.subr.mxu0 0.0
    %265 = vmatpush1.msra.mxu0 0.0
    %266 = vmatprep.subr.mxu0 0.0
    %267 = vmatpush1.msra.mxu0 0.0
    %268 = vmatprep.subr.mxu0 0.0
    %269 = vmatpush1.msra.mxu0 0.0
    %270 = vmatprep.subr.mxu0 0.0
    %271 = vmatpush1.msra.mxu0 0.0
    %272 = vmatprep.subr.mxu0 0.0
    %273 = vmatpush1.msra.mxu0 0.0
    %274 = vmatprep.subr.mxu0 0.0
    %275 = vmatpush1.msra.mxu0 0.0
    %276 = vmatprep.subr.mxu0 0.0
    %277 = vmatpush1.msra.mxu0 0.0
    %278 = vmatprep.subr.mxu0 0.0
    %279 = vmatpush1.msra.mxu0 0.0
    %280 = vmatprep.subr.mxu0 0.0
    %281 = vmatpush1.msra.mxu0 0.0
    %282 = vmatprep.subr.mxu0 0.0
    %283 = vmatpush1.msra.mxu0 0.0
    %284 = vmatprep.mubr.f32.mxu0 0.0
    %285 = vmatmul.mubr.f32.gmra.mrb[0].mxu0 %v218
    %v286 = vpop.f32.mrb[0].mxu0
    %v287 = vadd.f32 %v214, %v286
    %v288 = vpop.f32.mrb[0].mxu0
    %289 = vdwg.mxu0
    %v290 = vmax.f32 %v287, 0.0
    %v291 = vld [vmem:[#allocation11] sm:$0xff]
    %v292 = vld [vmem:[#allocation11 + $0x8] sm:$0xff]
    %v293 = vld [vmem:[#allocation11 + $0x10] sm:$0xff]
    %v294 = vld [vmem:[#allocation11 + $0x18] sm:$0xff]
    %v295 = vld [vmem:[#allocation13] sm:$0x1]
    %v297 = vlaneseq
    %v298 = vshrl.u32 %v297, 7
    %v299 = vsub.s32 0, %v298
    %v300 = vrot.slane %v295, %v299
    %v303 = vsel %vm126, %v290, 0
    %305 = vmatprep.subr.mxu0 0.0
    %306 = vmatpush1.msra.mxu0 %v291
    %307 = vmatprep.subr.mxu0 0.0
    %308 = vmatpush1.msra.mxu0 %v292
    %309 = vmatprep.subr.mxu0 0.0
    %310 = vmatpush1.msra.mxu0 %v293
    %311 = vmatprep.subr.mxu0 0.0
    %312 = vmatpush1.msra.mxu0 %v294
    %313 = vmatprep.subr.mxu0 0.0
    %314 = vmatpush1.msra.mxu0 0.0
    %315 = vmatprep.subr.mxu0 0.0
    %316 = vmatpush1.msra.mxu0 0.0
    %317 = vmatprep.subr.mxu0 0.0
    %318 = vmatpush1.msra.mxu0 0.0
    %319 = vmatprep.subr.mxu0 0.0
    %320 = vmatpush1.msra.mxu0 0.0
    %321 = vmatprep.subr.mxu0 0.0
    %322 = vmatpush1.msra.mxu0 0.0
    %323 = vmatprep.subr.mxu0 0.0
    %324 = vmatpush1.msra.mxu0 0.0
    %325 = vmatprep.subr.mxu0 0.0
    %326 = vmatpush1.msra.mxu0 0.0
    %327 = vmatprep.subr.mxu0 0.0
    %328 = vmatpush1.msra.mxu0 0.0
    %329 = vmatprep.subr.mxu0 0.0
    %330 = vmatpush1.msra.mxu0 0.0
    %331 = vmatprep.subr.mxu0 0.0
    %332 = vmatpush1.msra.mxu0 0.0
    %333 = vmatprep.subr.mxu0 0.0
    %334 = vmatpush1.msra.mxu0 0.0
    %335 = vmatprep.subr.mxu0 0.0
    %336 = vmatpush1.msra.mxu0 0.0
    %337 = vmatprep.subr.mxu0 0.0
    %338 = vmatpush1.msra.mxu0 0.0
    %339 = vmatprep.subr.mxu0 0.0
    %340 = vmatpush1.msra.mxu0 0.0
    %341 = vmatprep.subr.mxu0 0.0
    %342 = vmatpush1.msra.mxu0 0.0
    %343 = vmatprep.subr.mxu0 0.0
    %344 = vmatpush1.msra.mxu0 0.0
    %345 = vmatprep.subr.mxu0 0.0
    %346 = vmatpush1.msra.mxu0 0.0
    %347 = vmatprep.subr.mxu0 0.0
    %348 = vmatpush1.msra.mxu0 0.0
    %349 = vmatprep.subr.mxu0 0.0
    %350 = vmatpush1.msra.mxu0 0.0
    %351 = vmatprep.subr.mxu0 0.0
    %352 = vmatpush1.msra.mxu0 0.0
    %353 = vmatprep.subr.mxu0 0.0
    %354 = vmatpush1.msra.mxu0 0.0
    %355 = vmatprep.subr.mxu0 0.0
    %356 = vmatpush1.msra.mxu0 0.0
    %357 = vmatprep.subr.mxu0 0.0
    %358 = vmatpush1.msra.mxu0 0.0
    %359 = vmatprep.subr.mxu0 0.0
    %360 = vmatpush1.msra.mxu0 0.0
    %361 = vmatprep.subr.mxu0 0.0
    %362 = vmatpush1.msra.mxu0 0.0
    %363 = vmatprep.subr.mxu0 0.0
    %364 = vmatpush1.msra.mxu0 0.0
    %365 = vmatprep.subr.mxu0 0.0
    %366 = vmatpush1.msra.mxu0 0.0
    %367 = vmatprep.subr.mxu0 0.0
    %368 = vmatpush1.msra.mxu0 0.0
    %369 = vmatprep.mubr.f32.mxu0 0.0
    %370 = vmatmul.mubr.f32.gmra.mrb[0].mxu0 %v303
    %v371 = vpop.f32.mrb[0].mxu0
    %v372 = vadd.f32 %v300, %v371
    %v373 = vpop.f32.mrb[0].mxu0
    %374 = vdwg.mxu0
    %vm375 = vcmask 130048
    %v376 = vsel %vm375, %v372, -inf
    %377 = vmax.xlane.f32.xlu0 %v376
    %v378 = vpop.xlane.xlu0 %377
    %v379 = vsub.f32 %v372, %v378
    %v380 = vmul.f32 %v379, 1.442695
    %v381 = vpow.pop %v380
    %v382 = vsel %vm375, %v381, 0.0
    %383 = vadd.xlane.f32.xlu0 %v382
    %v384 = vpop.xlane.xlu0 %383
    %v385 = vrcp.pop %v384
    %v386 = vmul.f32 %v381, %v385
    %387 = vst.msk [vmem:[#allocation14] sm:$0xff] %vm375, %v386
    // Predicated region
    $region58: #{tpu_custom_call.1} parent=1 // pred_check
      _
    $region59: #{tpu_custom_call.1} parent=1 // pred_check_branch
      %389 = sbr.rel (0) target = $region61
    $region60: #{tpu_custom_call.1} parent=1 // pred_region
      %s391 = ssub.s32 128, 128
      %392 = vsyncadd [#allocation4], %s391
      %s394 = sshll.u32 [#allocation14], 4
      %s395 = int_to_ptr.vmem [resolvable:$true] %s394
      %397 = dma.vmem_to_hbm [thread:$0]  %s395, 128, %s7, [#allocation4]
    $region61: #{tpu_custom_call.1} parent=1 // pred_fallthru
      _
    // Predicated region
    $region62: #{tpu_custom_call.1} parent=1 // pred_check
      _
    $region63: #{tpu_custom_call.1} parent=1 // pred_check_branch
      %399 = sbr.rel (0) target = $region65
    $region64: #{tpu_custom_call.1} parent=1 // pred_region
      %400 = dma.done [#allocation4], 128
    $region65: #{tpu_custom_call.1} parent=1 // pred_fallthru
      _
    %401 = vsyncpa [#allocation3], 1
    %402 = vsyncpa [#allocation6], 1
    %403 = vsyncpa [#allocation9], 1
    %404 = vsyncpa [#allocation12], 1
    %405 = vsyncpa [#allocation4], 1

</llo_original>
